<compile_context>
chip_gen: v7x
topology: tpu7x:2x2x1
jax: 0.10.0
libtpu: 0.0.40
codegen_flags: <defaults>
</compile_context>

<pallas_src>
import jax
import jax.numpy as jnp
from jax.experimental import pallas as pl
from jax.experimental.pallas import tpu as pltpu

C_IN = 92
C_OUT = 3
KH, KW = 5, 45
PAD_H, PAD_W = 0, 5
# stride = (36047394, 832226597) -- irrelevant when H_in == W_in == 1.
H_OUT = KH - 2 * PAD_H            # 5
W_OUT = KW - 2 * PAD_W            # 35
F_OUT = C_OUT * H_OUT * W_OUT     # 525
MAX_TILE_N = 512                  # >=256 rows amortizes ~0.35us/step grid overhead;
                                  # 2-buffered (512, 525) bf16 out tiles ~= 1.1 MiB,
                                  # safe under every gen's default scoped VMEM.


def _round_up(a, b):
    return pl.cdiv(a, b) * b


def _convt_tanh_kernel(x_ref, w_ref, b_ref, o_ref):
    # x_ref: (tile_n, 92)  f32  -- cast to bf16 on the VPU (hidden under DMA/MXU)
    # w_ref: (92, 525)     bf16 -- grid-invariant, stays VMEM-resident
    # b_ref: (1, 525)      f32  -- grid-invariant
    # o_ref: (tile_n, 525) bf16 -- bf16 store halves output HBM traffic
    x = x_ref[...].astype(jnp.bfloat16)
    acc = jnp.dot(x, w_ref[...], preferred_element_type=jnp.float32)
    # Bias add + tanh kept in f32 (v5e has no bf16 EUP/VPU), store in bf16.
    o_ref[...] = jnp.tanh(acc + b_ref[...]).astype(o_ref.dtype)


def prepare_params(weight, bias):
    """One-time (init-path) preprocessing of the ConvTranspose2d parameters.

    weight: (Cin=92, Cout=3, kH=5, kW=45) PyTorch layout; bias: (3,).
    Returns MXU-friendly operands:
      w2d: (92, 525) bf16  -- taps surviving output padding, flattened
      b2d: (1, 525)  f32   -- bias broadcast over (H_OUT * W_OUT)
    """
    # oh = kh - pad_h -> kh in [0, KH);  ow = kw - pad_w -> kw in [pad_w, pad_w + W_OUT)
    w_eff = weight[:, :, :, PAD_W:PAD_W + W_OUT]                    # (92, 3, 5, 35)
    w2d = w_eff.reshape(C_IN, F_OUT).astype(jnp.bfloat16)           # (92, 525)
    b2d = jnp.repeat(bias.astype(jnp.float32), H_OUT * W_OUT).reshape(1, F_OUT)
    return w2d, b2d


@jax.jit
def conv_transpose_tanh(x_nchw, w2d, b2d):
    """x_nchw: (N, 92, 1, 1) f32; w2d: (92, 525) bf16; b2d: (1, 525) f32.

    Returns (N, 3, 5, 35) bf16 (tanh output is bounded in [-1, 1], bf16 store is
    the single biggest HBM-traffic win for this store-bound kernel).
    """
    N, cin, h_in, w_in = x_nchw.shape
    assert cin == C_IN
    # TODO(synk): general H_in/W_in > 1 with this stride would need ~1e8-sized
    # output spatial dims; only the 1x1 case is realizable, so only it is implemented.
    assert h_in == 1 and w_in == 1, (
        "stride=(36047394, 832226597) only tractable for 1x1 spatial input")

    x2d = x_nchw.reshape(N, C_IN)            # metadata-only; cast happens in-kernel

    # Grid shaping: >=2 (even) steps once N >= 64 so the batch axis shards across
    # v7x's two TensorCores and the writeback pipelines on single-TC chips.
    num_tiles = pl.cdiv(N, MAX_TILE_N)
    if N >= 64:
        num_tiles = max(num_tiles, 2)
        num_tiles += num_tiles % 2           # keep the parallel axis 2-TC balanced
    if num_tiles == 1:
        tile_n = N                           # full-dim block: legal for any N, no padding
    else:
        tile_n = _round_up(pl.cdiv(N, num_tiles), 8)   # last-tile pad < 8 rows
    grid = (pl.cdiv(N, tile_n),)

    cost = pl.CostEstimate(
        flops=2 * N * C_IN * F_OUT,
        transcendentals=N * F_OUT,
        bytes_accessed=(N * C_IN * 4          # x (f32 in)
                        + w2d.size * 2        # weights (bf16)
                        + b2d.size * 4        # bias (f32)
                        + N * F_OUT * 2),     # output (bf16)
    )

    out2d = pl.pallas_call(
        _convt_tanh_kernel,
        out_shape=jax.ShapeDtypeStruct((N, F_OUT), jnp.bfloat16),
        grid=grid,
        in_specs=[
            pl.BlockSpec((tile_n, C_IN), lambda i: (i, 0)),   # batch-tiled input (f32)
            pl.BlockSpec((C_IN, F_OUT), lambda i: (0, 0)),    # weight stays resident
            pl.BlockSpec((1, F_OUT), lambda i: (0, 0)),       # bias stays resident
        ],
        out_specs=pl.BlockSpec((tile_n, F_OUT), lambda i: (i, 0)),
        compiler_params=pltpu.CompilerParams(
            dimension_semantics=("parallel",)),
        cost_estimate=cost,
    )(x2d, w2d, b2d)

    # Contiguous (N, 525) -> (N, 3, 5, 35): metadata-only reshape, no HBM copy.
    return out2d.reshape(N, C_OUT, H_OUT, W_OUT)


if __name__ == "__main__":
    key = jax.random.PRNGKey(0)
    kx, kw, kb = jax.random.split(key, 3)

    N = 2
    # Deterministic "parameters" (shapes from ConvTranspose2d(92, 3, (5,45))).
    weight = jax.random.normal(kw, (C_IN, C_OUT, KH, KW), dtype=jnp.float32) * 0.05
    bias = jax.random.normal(kb, (C_OUT,), dtype=jnp.float32) * 0.1
    # Input consistent with forward(): NCHW with Cin=92; spatial 1x1 (see note above).
    x1 = jax.random.normal(kx, (N, C_IN, 1, 1), dtype=jnp.float32)

    # One-time init-path preprocessing (hoisted out of the per-call hot path).
    w2d, b2d = jax.block_until_ready(prepare_params(weight, bias))

    out = jax.block_until_ready(conv_transpose_tanh(x1, w2d, b2d))

    # Pure-JAX f32 reference for the same collapsed computation.
    ref = jnp.tanh(
        jnp.einsum("nc,cf->nf", x1.reshape(N, C_IN),
                   weight[:, :, :, PAD_W:PAD_W + W_OUT].reshape(C_IN, F_OUT))
        + jnp.repeat(bias, H_OUT * W_OUT)[None, :]
    ).reshape(N, C_OUT, H_OUT, W_OUT)

    assert out.shape == (N, C_OUT, H_OUT, W_OUT)
    assert out.dtype == jnp.bfloat16
    # bf16 MXU operands + bf16 store (f32 accumulate) -> looser tolerance vs f32 ref.
    assert jnp.allclose(out.astype(jnp.float32), ref, atol=2e-2, rtol=2e-2), \
        float(jnp.max(jnp.abs(out.astype(jnp.float32) - ref)))

    print("KERNEL_OK")
</pallas_src>

<mosaic_0001>
module attributes {stable_mosaic.version = 11 : i64} {
  func.func @_convt_tanh_kernel(%arg0: i32, %arg1: memref<2x92xf32, #tpu.memory_space<vmem>>, %arg2: memref<92x525xbf16, #tpu.memory_space<vmem>>, %arg3: memref<1x525xf32, #tpu.memory_space<vmem>>, %arg4: memref<2x525xbf16, #tpu.memory_space<vmem>>) attributes {dimension_semantics = [#tpu.dimension_semantics<parallel>], iteration_bounds = array<i64: 1>, scalar_prefetch = 0 : i64, scratch_operands = 0 : i64, tpu.core_type = #tpu.core_type<tc>, window_params = [{transform_indices = @transform_0, window_bounds = array<i64: 2, 92>}, {pipeline_mode = #tpu.pipeline_mode<synchronous>, transform_indices = @transform_1, window_bounds = array<i64: 92, 525>}, {pipeline_mode = #tpu.pipeline_mode<synchronous>, transform_indices = @transform_2, window_bounds = array<i64: 1, 525>}, {transform_indices = @transform_3, window_bounds = array<i64: 2, 525>}]} {
    %c0 = arith.constant 0 : index
    %c0_0 = arith.constant 0 : index
    %0 = vector.load %arg1[%c0, %c0_0] : memref<2x92xf32, #tpu.memory_space<vmem>>, vector<2x92xf32>
    %1 = arith.truncf %0 : vector<2x92xf32> to vector<2x92xbf16>
    %c0_1 = arith.constant 0 : index
    %c0_2 = arith.constant 0 : index
    %2 = vector.load %arg2[%c0_1, %c0_2] : memref<92x525xbf16, #tpu.memory_space<vmem>>, vector<92x525xbf16>
    %cst = arith.constant dense<0.000000e+00> : vector<2x525xf32>
    %3 = tpu.matmul %1, %2, %cst {dimension_numbers = #tpu.dot_dimension_numbers<[1], [0], [0], [1], [0, 0, 1, 1], [], []>} : vector<2x92xbf16>, vector<92x525xbf16>, vector<2x525xf32> -> vector<2x525xf32>
    %c0_3 = arith.constant 0 : index
    %c0_4 = arith.constant 0 : index
    %4 = vector.load %arg3[%c0_3, %c0_4] : memref<1x525xf32, #tpu.memory_space<vmem>>, vector<1x525xf32>
    %5 = vector.broadcast %4 : vector<1x525xf32> to vector<2x525xf32>
    %6 = arith.addf %3, %5 : vector<2x525xf32>
    %7 = math.tanh %6 : vector<2x525xf32>
    %8 = arith.truncf %7 : vector<2x525xf32> to vector<2x525xbf16>
    %c0_5 = arith.constant 0 : index
    %c0_6 = arith.constant 0 : index
    %9 = vector.load %arg4[%c0_5, %c0_6] : memref<2x525xbf16, #tpu.memory_space<vmem>>, vector<2x525xbf16>
    tpu.vector_store %arg4[%c0_5, %c0_6], %8 {strides = array<i32>} : memref<2x525xbf16, #tpu.memory_space<vmem>>, vector<2x525xbf16>,
    return
  }
  func.func @transform_0(%arg0: i32) -> (i32, i32) {
    %c0_i32 = arith.constant 0 : i32
    %c0_i32_0 = arith.constant 0 : i32
    return %arg0, %c0_i32 : i32, i32
  }
  func.func @transform_1(%arg0: i32) -> (i32, i32) {
    %c0_i32 = arith.constant 0 : i32
    %c0_i32_0 = arith.constant 0 : i32
    %c0_i32_1 = arith.constant 0 : i32
    return %c0_i32, %c0_i32_0 : i32, i32
  }
  func.func @transform_2(%arg0: i32) -> (i32, i32) {
    %c0_i32 = arith.constant 0 : i32
    %c0_i32_0 = arith.constant 0 : i32
    %c0_i32_1 = arith.constant 0 : i32
    return %c0_i32, %c0_i32_0 : i32, i32
  }
  func.func @transform_3(%arg0: i32) -> (i32, i32) {
    %c0_i32 = arith.constant 0 : i32
    %c0_i32_0 = arith.constant 0 : i32
    return %arg0, %c0_i32 : i32, i32
  }
}

</mosaic_0001>

<llo_original>
// kernel: conv_transpose_tanh.1
$region0: #{conv_transpose_tanh.1}
  #allocation0 [shape = 'u32[]', space=smem, size = 0x4, offset = 0x4, fixed_abs, tag = 'smem constant byte address 0x4 - core index']
  #allocation1 [shape = 'u32[144,128]{1,0:T(1,128)}', space=vmem, size = 0x12000, scoped, tag = 'internal scratch']
  %s0 = inlined_call_operand.vmem [shape: f32[2,92], index: 0, kind: input, shape index: {}]
  %s1 = inlined_call_operand.hbm [shape: bf16[92,525], index: 1, kind: input, shape index: {}]
  %s2 = inlined_call_operand.vmem [shape: f32[1,525], index: 2, kind: input, shape index: {}]
  %s3 = inlined_call_operand.vmem [shape: bf16[2,525], index: 3, kind: output, shape index: {}]
  %s4 = sld [smem:[#allocation0]]
  $region26: #{conv_transpose_tanh.1} parent=0
    _
  %s6 = ssub.s32 1, %s4
  %s7 = scalar_select 0, %s6, %s4
  $region1: #{conv_transpose_tanh.1} parent=0
    #allocation2 [shape = 'u8[122880]{0}', space=vmem, size = 0x1e000, scoped, tag = 'input window, operand 1, single buffered']
    #allocation3 [shape = 's32[1]{0}', space=sflag, size = 0x4, scoped, tag = 'scoped memory for conv_transpose_tanh.1']
    %8 = vsyncpa [#allocation3], 0
    // Predicated region
    $region2: #{conv_transpose_tanh.1} parent=1 // pred_check
      _
    $region3: #{conv_transpose_tanh.1} parent=1 // pred_check_branch
      %10 = sbr.rel (0) target = $region5
    $region4: #{conv_transpose_tanh.1} parent=1 // pred_region
      _
    $region5: #{conv_transpose_tanh.1} parent=1 // pred_fallthru
      _
    // Predicated region
    $region6: #{conv_transpose_tanh.1} parent=1 // pred_check
      _
    $region7: #{conv_transpose_tanh.1} parent=1 // pred_check_branch
      %12 = sbr.rel (0) target = $region9
    $region8: #{conv_transpose_tanh.1} parent=1 // pred_region
      %s14 = ssub.s32 3840, 3840
      %15 = vsyncadd [#allocation3], %s14
      %s16 = sshll.u32 [#allocation2], 4
      %s17 = int_to_ptr.vmem [resolvable:$true] %s16
      %22 = dma.hbm_to_vmem [thread:$0]  %s1, 3840, %s17, [#allocation3], 320, 320, 20
    $region9: #{conv_transpose_tanh.1} parent=1 // pred_fallthru
      _
    // Predicated region
    $region10: #{conv_transpose_tanh.1} parent=1 // pred_check
      _
    $region11: #{conv_transpose_tanh.1} parent=1 // pred_check_branch
      %24 = sbr.rel (0) target = $region13
    $region12: #{conv_transpose_tanh.1} parent=1 // pred_region
      _
    $region13: #{conv_transpose_tanh.1} parent=1 // pred_fallthru
      _
    // Predicated region
    $region14: #{conv_transpose_tanh.1} parent=1 // pred_check
      _
    $region15: #{conv_transpose_tanh.1} parent=1 // pred_check_branch
      %26 = sbr.rel (0) target = $region17
    $region16: #{conv_transpose_tanh.1} parent=1 // pred_region
      %27 = dma.done [#allocation3], 3840
    $region17: #{conv_transpose_tanh.1} parent=1 // pred_fallthru
      _
    %v29 = vld [vmem:[%s0] sm:$0x3]
    %v30 = vpack.c.bf16 %v29, %v29
    %v31 = vld [vmem:[#allocation2] sm:$0xff]
    %v32 = vld [vmem:[#allocation2 + $0x8] sm:$0xff]
    %v33 = vld [vmem:[#allocation2 + $0x10] sm:$0xf]
    %v34 = vld [vmem:[#allocation2 + $0x14] sm:$0xff]
    %v35 = vld [vmem:[#allocation2 + $0x1c] sm:$0xff]
    %v36 = vld [vmem:[#allocation2 + $0x24] sm:$0xf]
    %v37 = vld [vmem:[#allocation2 + $0x28] sm:$0xff]
    %v38 = vld [vmem:[#allocation2 + $0x30] sm:$0xff]
    %v39 = vld [vmem:[#allocation2 + $0x38] sm:$0xf]
    %v40 = vld [vmem:[#allocation2 + $0x3c] sm:$0xff]
    %v41 = vld [vmem:[#allocation2 + $0x44] sm:$0xff]
    %v42 = vld [vmem:[#allocation2 + $0x4c] sm:$0xf]
    %v43 = vld [vmem:[#allocation2 + $0x50] sm:$0xff]
    %v44 = vld [vmem:[#allocation2 + $0x58] sm:$0xff]
    %v45 = vld [vmem:[#allocation2 + $0x60] sm:$0xf]
    %v46 = vld [vmem:[#allocation2 + $0x64] sm:$0xff]
    %v47 = vld [vmem:[#allocation2 + $0x6c] sm:$0xff]
    %v48 = vld [vmem:[#allocation2 + $0x74] sm:$0xf]
    %v49 = vld [vmem:[#allocation2 + $0x78] sm:$0xff]
    %v50 = vld [vmem:[#allocation2 + $0x80] sm:$0xff]
    %v51 = vld [vmem:[#allocation2 + $0x88] sm:$0xf]
    %v52 = vld [vmem:[#allocation2 + $0x8c] sm:$0xff]
    %v53 = vld [vmem:[#allocation2 + $0x94] sm:$0xff]
    %v54 = vld [vmem:[#allocation2 + $0x9c] sm:$0xf]
    %v55 = vld [vmem:[#allocation2 + $0xa0] sm:$0xff]
    %v56 = vld [vmem:[#allocation2 + $0xa8] sm:$0xff]
    %v57 = vld [vmem:[#allocation2 + $0xb0] sm:$0xf]
    %v58 = vld [vmem:[#allocation2 + $0xb4] sm:$0xff]
    %v59 = vld [vmem:[#allocation2 + $0xbc] sm:$0xff]
    %v60 = vld [vmem:[#allocation2 + $0xc4] sm:$0xf]
    %v61 = vld [vmem:[#allocation2 + $0xc8] sm:$0xff]
    %v62 = vld [vmem:[#allocation2 + $0xd0] sm:$0xff]
    %v63 = vld [vmem:[#allocation2 + $0xd8] sm:$0xf]
    %v64 = vld [vmem:[#allocation2 + $0xdc] sm:$0x33]
    %v65 = vld [vmem:[#allocation2 + $0xe4] sm:$0x33]
    %v66 = vld [vmem:[#allocation2 + $0xec] sm:$0x3]
    %v67 = vld [vmem:[%s2] sm:$0x1f]
    %v69 = vlaneseq
    %v70 = vshrl.u32 %v69, 7
    %v71 = vsub.s32 0, %v70
    %v72 = vrot.slane %v67, %v71
    %v73 = vlaneseq
    %v74 = vshrl.u32 %v73, 7
    %v75 = vsub.s32 1, %v74
    %v76 = vrot.slane %v67, %v75
    %v77 = vlaneseq
    %v78 = vshrl.u32 %v77, 7
    %v79 = vsub.s32 2, %v78
    %v80 = vrot.slane %v67, %v79
    %v81 = vlaneseq
    %v82 = vshrl.u32 %v81, 7
    %v83 = vsub.s32 3, %v82
    %v84 = vrot.slane %v67, %v83
    %v85 = vlaneseq
    %v86 = vshrl.u32 %v85, 7
    %v87 = vsub.s32 4, %v86
    %v88 = vrot.slane %v67, %v87
    %v130 = vunpack.c.l.b16 %v31
    %v131 = vunpack.c.h.b16 %v31
    %v132 = vunpack.c.l.b16 %v32
    %v133 = vunpack.c.h.b16 %v32
    %v134 = vunpack.c.l.b16 %v33
    %v135 = vunpack.c.l.b16 %v34
    %v136 = vunpack.c.h.b16 %v34
    %v137 = vunpack.c.l.b16 %v35
    %v138 = vunpack.c.h.b16 %v35
    %v139 = vunpack.c.l.b16 %v36
    %v140 = vunpack.c.l.b16 %v37
    %v141 = vunpack.c.h.b16 %v37
    %v142 = vunpack.c.l.b16 %v38
    %v143 = vunpack.c.h.b16 %v38
    %v144 = vunpack.c.l.b16 %v39
    %v145 = vunpack.c.l.b16 %v40
    %v146 = vunpack.c.h.b16 %v40
    %v147 = vunpack.c.l.b16 %v41
    %v148 = vunpack.c.h.b16 %v41
    %v149 = vunpack.c.l.b16 %v42
    %v150 = vunpack.c.l.b16 %v43
    %v151 = vunpack.c.h.b16 %v43
    %v152 = vunpack.c.l.b16 %v44
    %v153 = vunpack.c.h.b16 %v44
    %v154 = vunpack.c.l.b16 %v45
    %v155 = vunpack.c.l.b16 %v46
    %v156 = vunpack.c.h.b16 %v46
    %v157 = vunpack.c.l.b16 %v47
    %v158 = vunpack.c.h.b16 %v47
    %v159 = vunpack.c.l.b16 %v48
    %v160 = vunpack.c.l.b16 %v49
    %v161 = vunpack.c.h.b16 %v49
    %v162 = vunpack.c.l.b16 %v50
    %v163 = vunpack.c.h.b16 %v50
    %v164 = vunpack.c.l.b16 %v51
    %v165 = vunpack.c.l.b16 %v52
    %v166 = vunpack.c.h.b16 %v52
    %v167 = vunpack.c.l.b16 %v53
    %v168 = vunpack.c.h.b16 %v53
    %v169 = vunpack.c.l.b16 %v54
    %v170 = vunpack.c.l.b16 %v55
    %v171 = vunpack.c.h.b16 %v55
    %v172 = vunpack.c.l.b16 %v56
    %v173 = vunpack.c.h.b16 %v56
    %v174 = vunpack.c.l.b16 %v57
    %v175 = vunpack.c.l.b16 %v58
    %v176 = vunpack.c.h.b16 %v58
    %v177 = vunpack.c.l.b16 %v59
    %v178 = vunpack.c.h.b16 %v59
    %v179 = vunpack.c.l.b16 %v60
    %v180 = vunpack.c.l.b16 %v61
    %v181 = vunpack.c.h.b16 %v61
    %v182 = vunpack.c.l.b16 %v62
    %v183 = vunpack.c.h.b16 %v62
    %v184 = vunpack.c.l.b16 %v63
    %v185 = vunpack.c.l.b16 %v64
    %v186 = vunpack.c.h.b16 %v64
    %v187 = vunpack.c.l.b16 %v65
    %v188 = vunpack.c.h.b16 %v65
    %v189 = vunpack.c.l.b16 %v66
    %v190 = vpack.c.b16 %v135, %v130
    %v191 = vpack.c.b16 %v136, %v131
    %v192 = vpack.c.b16 %v137, %v132
    %v193 = vpack.c.b16 %v138, %v133
    %v194 = vpack.c.b16 %v139, %v134
    %v195 = vpack.c.b16 %v145, %v140
    %v196 = vpack.c.b16 %v146, %v141
    %v197 = vpack.c.b16 %v147, %v142
    %v198 = vpack.c.b16 %v148, %v143
    %v199 = vpack.c.b16 %v149, %v144
    %v200 = vpack.c.b16 %v155, %v150
    %v201 = vpack.c.b16 %v156, %v151
    %v202 = vpack.c.b16 %v157, %v152
    %v203 = vpack.c.b16 %v158, %v153
    %v204 = vpack.c.b16 %v159, %v154
    %v205 = vpack.c.b16 %v165, %v160
    %v206 = vpack.c.b16 %v166, %v161
    %v207 = vpack.c.b16 %v167, %v162
    %v208 = vpack.c.b16 %v168, %v163
    %v209 = vpack.c.b16 %v169, %v164
    %v210 = vpack.c.b16 %v175, %v170
    %v211 = vpack.c.b16 %v176, %v171
    %v212 = vpack.c.b16 %v177, %v172
    %v213 = vpack.c.b16 %v178, %v173
    %v214 = vpack.c.b16 %v179, %v174
    %v215 = vpack.c.b16 %v185, %v180
    %v216 = vpack.c.b16 %v186, %v181
    %v217 = vpack.c.b16 %v187, %v182
    %v218 = vpack.c.b16 %v188, %v183
    %v219 = vpack.c.b16 %v189, %v184
    %vm245 = vcmask 752640
    %v247 = vsel %vm245, %v30, 0
    %vm249 = vcmask 1045504
    %v251 = vsel %vm249, %v215, 0
    %v254 = vsel %vm249, %v216, 0
    %v257 = vsel %vm249, %v217, 0
    %v260 = vsel %vm249, %v218, 0
    %v263 = vsel %vm249, %v219, 0
    %265 = vmatprep.subr.bf16.mxu0 %v191
    %266 = vmatpush1.bf16.msra.mxu0 %v190
    %267 = vmatprep.subr.bf16.mxu0 %v196
    %268 = vmatpush1.bf16.msra.mxu0 %v195
    %269 = vmatprep.subr.bf16.mxu0 %v201
    %270 = vmatpush1.bf16.msra.mxu0 %v200
    %271 = vmatprep.subr.bf16.mxu0 %v206
    %272 = vmatpush1.bf16.msra.mxu0 %v205
    %273 = vmatprep.subr.bf16.mxu0 %v211
    %274 = vmatpush1.bf16.msra.mxu0 %v210
    %275 = vmatprep.subr.bf16.mxu0 %v254
    %276 = vmatpush1.bf16.msra.mxu0 %v251
    %277 = vmatprep.subr.bf16.mxu0 0
    %278 = vmatpush1.bf16.msra.mxu0 0
    %279 = vmatprep.subr.bf16.mxu0 0
    %280 = vmatpush1.bf16.msra.mxu0 0
    %281 = vmatprep.subr.bf16.mxu0 0
    %282 = vmatpush1.bf16.msra.mxu0 0
    %283 = vmatprep.subr.bf16.mxu0 0
    %284 = vmatpush1.bf16.msra.mxu0 0
    %285 = vmatprep.subr.bf16.mxu0 0
    %286 = vmatpush1.bf16.msra.mxu0 0
    %287 = vmatprep.subr.bf16.mxu0 0
    %288 = vmatpush1.bf16.msra.mxu0 0
    %289 = vmatprep.subr.bf16.mxu0 0
    %290 = vmatpush1.bf16.msra.mxu0 0
    %291 = vmatprep.subr.bf16.mxu0 0
    %292 = vmatpush1.bf16.msra.mxu0 0
    %293 = vmatprep.subr.bf16.mxu0 0
    %294 = vmatpush1.bf16.msra.mxu0 0
    %295 = vmatprep.subr.bf16.mxu0 0
    %296 = vmatpush1.bf16.msra.mxu0 0
    %297 = vmatprep.mubr.bf16.mxu0 0
    %298 = vmatmul.mubr.bf16.gmra.mrb[0].mxu0 %v247
    %v299 = vpop.f32.mrb[0].mxu0
    %v300 = vadd.f32 %v72, %v299
    %v301 = vpop.f32.mrb[0].mxu0
    %v302 = vadd.f32 %v76, %v301
    %v303 = vpop.f32.mrb[0].mxu0
    %v304 = vpop.f32.mrb[0].mxu0
    %305 = vdwg.mxu0
    %306 = vmatprep.subr.bf16.mxu0 %v193
    %307 = vmatpush1.bf16.msra.mxu0 %v192
    %308 = vmatprep.subr.bf16.mxu0 %v198
    %309 = vmatpush1.bf16.msra.mxu0 %v197
    %310 = vmatprep.subr.bf16.mxu0 %v203
    %311 = vmatpush1.bf16.msra.mxu0 %v202
    %312 = vmatprep.subr.bf16.mxu0 %v208
    %313 = vmatpush1.bf16.msra.mxu0 %v207
    %314 = vmatprep.subr.bf16.mxu0 %v213
    %315 = vmatpush1.bf16.msra.mxu0 %v212
    %316 = vmatprep.subr.bf16.mxu0 %v260
    %317 = vmatpush1.bf16.msra.mxu0 %v257
    %318 = vmatprep.subr.bf16.mxu0 0
    %319 = vmatpush1.bf16.msra.mxu0 0
    %320 = vmatprep.subr.bf16.mxu0 0
    %321 = vmatpush1.bf16.msra.mxu0 0
    %322 = vmatprep.subr.bf16.mxu0 0
    %323 = vmatpush1.bf16.msra.mxu0 0
    %324 = vmatprep.subr.bf16.mxu0 0
    %325 = vmatpush1.bf16.msra.mxu0 0
    %326 = vmatprep.subr.bf16.mxu0 0
    %327 = vmatpush1.bf16.msra.mxu0 0
    %328 = vmatprep.subr.bf16.mxu0 0
    %329 = vmatpush1.bf16.msra.mxu0 0
    %330 = vmatprep.subr.bf16.mxu0 0
    %331 = vmatpush1.bf16.msra.mxu0 0
    %332 = vmatprep.subr.bf16.mxu0 0
    %333 = vmatpush1.bf16.msra.mxu0 0
    %334 = vmatprep.subr.bf16.mxu0 0
    %335 = vmatpush1.bf16.msra.mxu0 0
    %336 = vmatprep.subr.bf16.mxu0 0
    %337 = vmatpush1.bf16.msra.mxu0 0
    %338 = vmatprep.mubr.bf16.mxu0 0
    %339 = vmatmul.mubr.bf16.gmra.mrb[0].mxu0 %v247
    %v340 = vpop.f32.mrb[0].mxu0
    %v341 = vadd.f32 %v80, %v340
    %v342 = vpop.f32.mrb[0].mxu0
    %v343 = vadd.f32 %v84, %v342
    %v344 = vpop.f32.mrb[0].mxu0
    %v345 = vpop.f32.mrb[0].mxu0
    %346 = vdwg.mxu0
    %347 = vmatprep.subr.bf16.mxu0 0
    %348 = vmatpush1.bf16.msra.mxu0 %v194
    %349 = vmatprep.subr.bf16.mxu0 0
    %350 = vmatpush1.bf16.msra.mxu0 %v199
    %351 = vmatprep.subr.bf16.mxu0 0
    %352 = vmatpush1.bf16.msra.mxu0 %v204
    %353 = vmatprep.subr.bf16.mxu0 0
    %354 = vmatpush1.bf16.msra.mxu0 %v209
    %355 = vmatprep.subr.bf16.mxu0 0
    %356 = vmatpush1.bf16.msra.mxu0 %v214
    %357 = vmatprep.subr.bf16.mxu0 0
    %358 = vmatpush1.bf16.msra.mxu0 %v263
    %359 = vmatprep.subr.bf16.mxu0 0
    %360 = vmatpush1.bf16.msra.mxu0 0
    %361 = vmatprep.subr.bf16.mxu0 0
    %362 = vmatpush1.bf16.msra.mxu0 0
    %363 = vmatprep.subr.bf16.mxu0 0
    %364 = vmatpush1.bf16.msra.mxu0 0
    %365 = vmatprep.subr.bf16.mxu0 0
    %366 = vmatpush1.bf16.msra.mxu0 0
    %367 = vmatprep.subr.bf16.mxu0 0
    %368 = vmatpush1.bf16.msra.mxu0 0
    %369 = vmatprep.subr.bf16.mxu0 0
    %370 = vmatpush1.bf16.msra.mxu0 0
    %371 = vmatprep.subr.bf16.mxu0 0
    %372 = vmatpush1.bf16.msra.mxu0 0
    %373 = vmatprep.subr.bf16.mxu0 0
    %374 = vmatpush1.bf16.msra.mxu0 0
    %375 = vmatprep.subr.bf16.mxu0 0
    %376 = vmatpush1.bf16.msra.mxu0 0
    %377 = vmatprep.subr.bf16.mxu0 0
    %378 = vmatpush1.bf16.msra.mxu0 0
    %379 = vmatprep.mubr.bf16.mxu0 0
    %380 = vmatmul.mubr.bf16.gmra.mrb[0].mxu0 %v247
    %v381 = vpop.f32.mrb[0].mxu0
    %v382 = vadd.f32 %v88, %v381
    %v383 = vpop.f32.mrb[0].mxu0
    %v384 = vpop.f32.mrb[0].mxu0
    %v385 = vpop.f32.mrb[0].mxu0
    %386 = vdwg.mxu0
    %v387 = vtanh.pop %v300
    %v388 = vtanh.pop %v302
    %v389 = vtanh.pop %v341
    %v390 = vtanh.pop %v343
    %v391 = vtanh.pop %v382
    %v392 = vpack.c.bf16 %v387, %v387
    %v393 = vpack.c.bf16 %v388, %v388
    %v394 = vpack.c.bf16 %v389, %v389
    %v395 = vpack.c.bf16 %v390, %v390
    %v396 = vpack.c.bf16 %v391, %v391
    %v402 = vcombine.low %v392, %v393
    %v403 = vcombine.low %v394, %v395
    %v405 = vunpack.c.l.s4 1966171168
    %v406 = vunpack.c.0.s8 %v405
    %v407 = vlaneseq
    %v408 = vshrl.u32 %v407, 7
    %v409 = vsub.s32 %v406, %v408
    %v410 = vrot.slane %v402, %v409
    %v412 = vunpack.c.l.s4 1966171168
    %v413 = vunpack.c.0.s8 %v412
    %v414 = vlaneseq
    %v415 = vshrl.u32 %v414, 7
    %v416 = vsub.s32 %v413, %v415
    %v417 = vrot.slane %v403, %v416
    %v419 = vunpack.c.l.s4 1966171168
    %v420 = vunpack.c.0.s8 %v419
    %v421 = vlaneseq
    %v422 = vshrl.u32 %v421, 7
    %v423 = vsub.s32 %v420, %v422
    %v424 = vrot.slane %v396, %v423
    %v425 = vcombine.low %v410, %v417
    %v427 = vunpack.c.l.s4 1966171168
    %v428 = vunpack.c.0.s8 %v427
    %v429 = vlaneseq
    %v430 = vshrl.u32 %v429, 7
    %v431 = vsub.s32 %v428, %v430
    %v432 = vrot.slane %v425, %v431
    %v434 = vunpack.c.l.s4 1966171168
    %v435 = vunpack.c.0.s8 %v434
    %v436 = vlaneseq
    %v437 = vshrl.u32 %v436, 7
    %v438 = vsub.s32 %v435, %v437
    %v439 = vrot.slane %v424, %v438
    %v440 = vcombine.low %v432, %v439
    %vm442 = vcmask 1040384
    %vm443 = vcmask 1041409
    %vm444 = vmor %vm443, %vm442
    %vm445 = vcmask 1042434
    %vm446 = vmor %vm445, %vm444
    %vm447 = vcmask 1043459
    %vm448 = vmor %vm447, %vm446
    %vm449 = vcmask 102404
    %vm450 = vmor %vm449, %vm448
    %451 = vst.msk [vmem:[%s3] sm:$0x1f] %vm450, %v440
    // Predicated region
    $region18: #{conv_transpose_tanh.1} parent=1 // pred_check
      _
    $region19: #{conv_transpose_tanh.1} parent=1 // pred_check_branch
      %453 = sbr.rel (0) target = $region21
    $region20: #{conv_transpose_tanh.1} parent=1 // pred_region
      _
    $region21: #{conv_transpose_tanh.1} parent=1 // pred_fallthru
      _
    // Predicated region
    $region22: #{conv_transpose_tanh.1} parent=1 // pred_check
      _
    $region23: #{conv_transpose_tanh.1} parent=1 // pred_check_branch
      %455 = sbr.rel (0) target = $region25
    $region24: #{conv_transpose_tanh.1} parent=1 // pred_region
      _
    $region25: #{conv_transpose_tanh.1} parent=1 // pred_fallthru
      _
    %456 = vsyncpa [#allocation3], 1

</llo_original>
